<compile_context>
chip_gen: v7x
topology: tpu7x:2x2x1
jax: 0.10.0
libtpu: 0.0.40
codegen_flags: <defaults>
</compile_context>

<pallas_src>
import jax
import jax.numpy as jnp
from jax import lax
from jax.experimental import pallas as pl
from jax.experimental.pallas import tpu as pltpu
import numpy as np


def _bahdanau_kernel(q_ref,       # VMEM: [TB, H]      float32
                     len_ref,     # VMEM: [TB, 1]      int32
                     pk_ref,      # VMEM: [TB, S, H]   bfloat16
                     v_ref,       # VMEM: [TB, S, V]   bfloat16
                     wqt_ref,     # VMEM: [H, H]       float32 (pre-transposed W_q)
                     we_ref,      # VMEM: [1, H]       float32
                     out_ref):    # VMEM out: [TB, V+S] float32  (ctx | alphas)
    f32 = jnp.float32
    V = out_ref.shape[-1] - pk_ref.shape[1]          # static: V + S minus S

    q = q_ref[...]                                   # (TB, H)
    wqt = wqt_ref[...]                               # (H, H), already transposed
    we = we_ref[...]                                 # (1, H)
    lens = len_ref[...]                              # (TB, 1) int32

    # query_layer: one MXU matmul for the whole batch tile (M = TB).
    qp = jnp.dot(q, wqt, preferred_element_type=f32)                # (TB, H)

    # energy_layer(tanh(query + proj_key)); bf16 storage, f32 compute.
    # NOTE: on v6e/v7x a bf16 tanh would be cheaper if EUP ever saturates;
    # kept f32 so the same kernel runs on v5e (no bf16 EUP/VPU).
    pk = pk_ref[...].astype(f32)                                    # (TB, S, H)
    t = jnp.tanh(qp[:, None, :] + pk)                               # (TB, S, H)
    # (1,H) weight broadcast + lane reduce over H (VPU + XLU, MXU stays free).
    scores = jnp.sum(t * we[None, :, :], axis=-1)                   # (TB, S)

    # Mask positions >= src_length with -inf, then softmax over the seq axis.
    # TODO(synk): src_length == 0 yields all -inf scores -> NaN alphas, same as
    # the PyTorch reference; no extra guard added to keep semantics identical.
    pos = lax.broadcasted_iota(jnp.int32, scores.shape, 1)          # (TB, S)
    scores = jnp.where(pos < lens, scores, jnp.float32(-jnp.inf))

    m = jnp.max(scores, axis=-1, keepdims=True)                     # (TB, 1)
    e = jnp.exp(scores - m)                                         # (TB, S)
    denom = jnp.sum(e, axis=-1, keepdims=True)                      # (TB, 1)
    alphas = e / denom                                              # exact normalization

    # context = alphas @ value per batch: VPU mul + sublane reduce over S.
    v = v_ref[...].astype(f32)                                      # (TB, S, V)
    ctx = jnp.sum(alphas[:, :, None] * v, axis=1)                   # (TB, V)

    # Packed output slab -> single writeback DMA per grid step.
    out_ref[:, :V] = ctx.astype(out_ref.dtype)
    out_ref[:, V:] = alphas.astype(out_ref.dtype)


def _choose_batch_tile(batch, seq, hidden, vdim):
    """Pick rows-per-grid-step and the scoped-VMEM limit.

    Sized against v7x's 64 MiB VMEM/TensorCore (v5e/v6e have 128 MiB, so they
    simply get extra headroom).  Accounts for double-buffered pipelined blocks
    plus the f32 in-kernel temporaries (tanh result, alphas*value product).
    """
    row_io = (seq * hidden * 2          # proj_key block (bf16)
              + seq * vdim * 2          # value block (bf16)
              + hidden * 4 + 4          # query (f32) + length (i32)
              + (vdim + seq) * 4)       # packed output (f32)
    row_tmp = 2 * seq * (hidden + vdim) * 4   # f32 tanh / weighted-value temporaries
    per_row = 2 * row_io + row_tmp            # x2 = double-buffered I/O blocks

    budget = 36 * 1024 * 1024
    tb = max(8, (budget // per_row) // 8 * 8)

    bp8 = ((batch + 7) // 8) * 8
    tb = min(tb, bp8)
    if bp8 >= 16:
        # Keep >= 2 grid steps so v7x's two TensorCores both get work
        # (the batch-tile axis is marked "parallel").
        half = (((bp8 + 1) // 2) + 7) // 8 * 8
        tb = min(tb, half)

    vmem_limit = int(min(48 * 1024 * 1024,
                         max(32 * 1024 * 1024, per_row * tb + (4 << 20))))
    return tb, vmem_limit


def bahdanau_attention(query, proj_key, value, src_lengths, w_q, w_e):
    """Pallas implementation of BahdanauAttention.forward.

    query [B,1,H], proj_key [B,S,H], value [B,S,V], src_lengths [B],
    w_q [H,H] (PyTorch [out,in]), w_e [1,H].
    Returns (context [B,1,V], alphas [B,1,S])."""
    B, one, H = query.shape
    assert one == 1
    _, S, _ = proj_key.shape
    V = value.shape[-1]

    tb, vmem_limit = _choose_batch_tile(B, S, H, V)
    bp = ((B + tb - 1) // tb) * tb
    pad = bp - B

    q2 = query.reshape(B, H).astype(jnp.float32)
    lens2 = src_lengths.astype(jnp.int32).reshape(B, 1)
    # proj_key / value dominate HBM traffic -> store bf16, compute in f32.
    pk = proj_key.astype(jnp.bfloat16)
    v = value.astype(jnp.bfloat16)
    if pad:
        q2 = jnp.pad(q2, ((0, pad), (0, 0)))
        # Padded rows get length 1 so their (discarded) alphas stay finite.
        lens2 = jnp.pad(lens2, ((0, pad), (0, 0)), constant_values=1)
        pk = jnp.pad(pk, ((0, pad), (0, 0), (0, 0)))
        v = jnp.pad(v, ((0, pad), (0, 0), (0, 0)))

    # Pre-transpose W_q once in the wrapper: kernel contracts last x first dims.
    wq_t = jnp.transpose(w_q).astype(jnp.float32)                    # (H, H)
    w_e = w_e.astype(jnp.float32)                                    # (1, H)

    grid = (bp // tb,)

    # NOTE: if production H / V stay < 128, folding pk/v to 2-D lane-dense
    # slabs (B, S*H) / (B, S*V) would improve lane utilization further; the
    # 3-D blocks below are kept because the (tb, S, H) DMAs are contiguous.
    grid_spec = pltpu.PrefetchScalarGridSpec(
        num_scalar_prefetch=0,
        grid=grid,
        in_specs=[
            pl.BlockSpec((tb, H), lambda i: (i, 0)),                 # query (2-D)
            pl.BlockSpec((tb, 1), lambda i: (i, 0)),                 # lengths
            pl.BlockSpec((tb, S, H), lambda i: (i, 0, 0)),           # proj_key (bf16)
            pl.BlockSpec((tb, S, V), lambda i: (i, 0, 0)),           # value    (bf16)
            pl.BlockSpec((H, H), lambda i: (0, 0)),                  # W_q^T (grid-invariant)
            pl.BlockSpec((1, H), lambda i: (0, 0)),                  # W_e   (grid-invariant)
        ],
        out_specs=pl.BlockSpec((tb, V + S), lambda i: (i, 0)),       # packed ctx|alphas
    )

    out_shape = jax.ShapeDtypeStruct((bp, V + S), jnp.float32)

    cost = pl.CostEstimate(
        flops=2 * bp * (H * H + S * H + S * V) + 6 * bp * S * H,
        transcendentals=bp * S * (H + 1),
        bytes_accessed=(2 * bp * S * (H + V)             # bf16 proj_key + value
                        + 4 * bp * (H + 1 + V + S)       # query, lengths, packed out
                        + 4 * (H * H + H)),              # weights
    )

    packed = pl.pallas_call(
        _bahdanau_kernel,
        out_shape=out_shape,
        grid_spec=grid_spec,
        compiler_params=pltpu.CompilerParams(
            dimension_semantics=("parallel",),
            vmem_limit_bytes=vmem_limit),
        cost_estimate=cost,
    )(q2, lens2, pk, v, wq_t, w_e)

    ctx = packed[:B, :V]
    alphas = packed[:B, V:]
    return ctx.reshape(B, 1, V), alphas.reshape(B, 1, S)


def _reference(query, proj_key, value, src_lengths, w_q, w_e):
    """Plain-JAX f32 reference matching the PyTorch forward."""
    q = jnp.einsum("boh,kh->bok", query, w_q)                  # query_layer
    t = jnp.tanh(q + proj_key)                                 # (B,S,H)
    scores = jnp.einsum("bsh,oh->bso", t, w_e)                 # (B,S,1)
    scores = jnp.transpose(scores, (0, 2, 1))                  # (B,1,S)
    S = scores.shape[-1]
    pos = jnp.arange(S)[None, None, :]
    mask = pos < src_lengths[:, None, None]
    scores = jnp.where(mask, scores, -jnp.inf)
    alphas = jax.nn.softmax(scores, axis=-1)
    context = jnp.einsum("bos,bsv->bov", alphas, value)
    return context, alphas


if __name__ == "__main__":
    B, S, H = 2, 8, 32
    V = 2 * H  # num_layers * hidden_size with num_layers = 2 (key_size default)

    key = jax.random.PRNGKey(0)
    k1, k2, k3, k4, k5 = jax.random.split(key, 5)

    query = jax.random.normal(k1, (B, 1, H), dtype=jnp.float32)
    proj_key = jax.random.normal(k2, (B, S, H), dtype=jnp.float32)
    value = jax.random.normal(k3, (B, S, V), dtype=jnp.float32)
    src_lengths = jnp.array([S, S // 2], dtype=jnp.int32)

    # Deterministic parameter init (PyTorch Linear weight layout [out, in]).
    w_q = jax.random.normal(k4, (H, H), dtype=jnp.float32) * (1.0 / np.sqrt(H))
    w_e = jax.random.normal(k5, (1, H), dtype=jnp.float32) * (1.0 / np.sqrt(H))

    context, alphas = bahdanau_attention(query, proj_key, value,
                                         src_lengths, w_q, w_e)
    jax.block_until_ready((context, alphas))

    ctx_ref, alphas_ref = _reference(query, proj_key, value,
                                     src_lengths, w_q, w_e)

    assert context.shape == (B, 1, V)
    assert alphas.shape == (B, 1, S)
    # Tolerance covers the bf16 storage of proj_key/value (f32 accumulation,
    # exact softmax normalization in-kernel).
    np.testing.assert_allclose(np.asarray(context), np.asarray(ctx_ref),
                               rtol=2e-2, atol=2e-2)
    np.testing.assert_allclose(np.asarray(alphas), np.asarray(alphas_ref),
                               rtol=2e-2, atol=2e-2)

    print("KERNEL_OK")
</pallas_src>

<mosaic_0001>
module attributes {stable_mosaic.version = 11 : i64} {
  func.func @_bahdanau_kernel(%arg0: i32, %arg1: memref<8x32xf32, #tpu.memory_space<vmem>>, %arg2: memref<8x1xi32, #tpu.memory_space<vmem>>, %arg3: memref<8x8x32xbf16, #tpu.memory_space<vmem>>, %arg4: memref<8x8x64xbf16, #tpu.memory_space<vmem>>, %arg5: memref<32x32xf32, #tpu.memory_space<vmem>>, %arg6: memref<1x32xf32, #tpu.memory_space<vmem>>, %arg7: memref<8x72xf32, #tpu.memory_space<vmem>>) attributes {dimension_semantics = [#tpu.dimension_semantics<parallel>], iteration_bounds = array<i64: 1>, scalar_prefetch = 0 : i64, scratch_operands = 0 : i64, tpu.core_type = #tpu.core_type<tc>, window_params = [{transform_indices = @transform_0, window_bounds = array<i64: 8, 32>}, {transform_indices = @transform_1, window_bounds = array<i64: 8, 1>}, {transform_indices = @transform_2, window_bounds = array<i64: 8, 8, 32>}, {transform_indices = @transform_3, window_bounds = array<i64: 8, 8, 64>}, {pipeline_mode = #tpu.pipeline_mode<synchronous>, transform_indices = @transform_4, window_bounds = array<i64: 32, 32>}, {pipeline_mode = #tpu.pipeline_mode<synchronous>, transform_indices = @transform_5, window_bounds = array<i64: 1, 32>}, {transform_indices = @transform_6, window_bounds = array<i64: 8, 72>}]} {
    %c0 = arith.constant 0 : index
    %c0_0 = arith.constant 0 : index
    %0 = vector.load %arg1[%c0, %c0_0] : memref<8x32xf32, #tpu.memory_space<vmem>>, vector<8x32xf32>
    %c0_1 = arith.constant 0 : index
    %c0_2 = arith.constant 0 : index
    %1 = vector.load %arg5[%c0_1, %c0_2] : memref<32x32xf32, #tpu.memory_space<vmem>>, vector<32x32xf32>
    %c0_3 = arith.constant 0 : index
    %c0_4 = arith.constant 0 : index
    %2 = vector.load %arg6[%c0_3, %c0_4] : memref<1x32xf32, #tpu.memory_space<vmem>>, vector<1x32xf32>
    %c0_5 = arith.constant 0 : index
    %c0_6 = arith.constant 0 : index
    %3 = vector.load %arg2[%c0_5, %c0_6] : memref<8x1xi32, #tpu.memory_space<vmem>>, vector<8x1xi32>
    %cst = arith.constant dense<0.000000e+00> : vector<8x32xf32>
    %4 = tpu.matmul %0, %1, %cst {dimension_numbers = #tpu.dot_dimension_numbers<[1], [0], [0], [1], [0, 0, 1, 1], [], []>} : vector<8x32xf32>, vector<32x32xf32>, vector<8x32xf32> -> vector<8x32xf32>
    %c0_7 = arith.constant 0 : index
    %c0_8 = arith.constant 0 : index
    %c0_9 = arith.constant 0 : index
    %5 = vector.load %arg3[%c0_7, %c0_8, %c0_9] : memref<8x8x32xbf16, #tpu.memory_space<vmem>>, vector<8x8x32xbf16>
    %6 = arith.extf %5 : vector<8x8x32xbf16> to vector<8x8x32xf32>
    %7 = vector.shape_cast %4 : vector<8x32xf32> to vector<8x1x32xf32>
    %8 = vector.broadcast %7 : vector<8x1x32xf32> to vector<8x8x32xf32>
    %9 = arith.addf %8, %6 : vector<8x8x32xf32>
    %10 = math.tanh %9 : vector<8x8x32xf32>
    %11 = vector.shape_cast %2 : vector<1x32xf32> to vector<1x1x32xf32>
    %12 = vector.broadcast %11 : vector<1x1x32xf32> to vector<8x8x32xf32>
    %13 = arith.mulf %10, %12 : vector<8x8x32xf32>
    %cst_10 = arith.constant dense<0.000000e+00> : vector<8x8xf32>
    %14 = vector.multi_reduction <add>, %13, %cst_10 [2] : vector<8x8x32xf32> to vector<8x8xf32>
    %15 = tpu.iota {dimensions = array<i32: 1>} : vector<8x8xi32>
    %16 = vector.broadcast %3 : vector<8x1xi32> to vector<8x8xi32>
    %17 = arith.cmpi slt, %15, %16 : vector<8x8xi32>
    %cst_11 = arith.constant 0xFF800000 : f32
    %18 = vector.broadcast %cst_11 : f32 to vector<8x8xf32>
    %19 = arith.select %17, %14, %18 : vector<8x8xi1>, vector<8x8xf32>
    %cst_12 = arith.constant dense<0xFF800000> : vector<8xf32>
    %20 = vector.multi_reduction <maximumf>, %19, %cst_12 [1] : vector<8x8xf32> to vector<8xf32>
    %21 = vector.shape_cast %20 : vector<8xf32> to vector<8x1xf32>
    %22 = vector.broadcast %21 : vector<8x1xf32> to vector<8x8xf32>
    %23 = arith.subf %19, %22 : vector<8x8xf32>
    %24 = math.exp %23 : vector<8x8xf32>
    %cst_13 = arith.constant dense<0.000000e+00> : vector<8xf32>
    %25 = vector.multi_reduction <add>, %24, %cst_13 [1] : vector<8x8xf32> to vector<8xf32>
    %26 = vector.shape_cast %25 : vector<8xf32> to vector<8x1xf32>
    %27 = vector.broadcast %26 : vector<8x1xf32> to vector<8x8xf32>
    %28 = arith.divf %24, %27 : vector<8x8xf32>
    %c0_14 = arith.constant 0 : index
    %c0_15 = arith.constant 0 : index
    %c0_16 = arith.constant 0 : index
    %29 = vector.load %arg4[%c0_14, %c0_15, %c0_16] : memref<8x8x64xbf16, #tpu.memory_space<vmem>>, vector<8x8x64xbf16>
    %30 = arith.extf %29 : vector<8x8x64xbf16> to vector<8x8x64xf32>
    %31 = vector.shape_cast %28 : vector<8x8xf32> to vector<8x8x1xf32>
    %32 = vector.broadcast %31 : vector<8x8x1xf32> to vector<8x8x64xf32>
    %33 = arith.mulf %32, %30 : vector<8x8x64xf32>
    %cst_17 = arith.constant dense<0.000000e+00> : vector<8x64xf32>
    %34 = vector.multi_reduction <add>, %33, %cst_17 [1] : vector<8x8x64xf32> to vector<8x64xf32>
    %c0_18 = arith.constant 0 : index
    %c0_19 = arith.constant 0 : index
    %35 = vector.load %arg7[%c0_18, %c0_19] : memref<8x72xf32, #tpu.memory_space<vmem>>, vector<8x64xf32>
    tpu.vector_store %arg7[%c0_18, %c0_19], %34 {strides = array<i32>} : memref<8x72xf32, #tpu.memory_space<vmem>>, vector<8x64xf32>,
    %c0_20 = arith.constant 0 : index
    %c64 = arith.constant 64 : index
    %36 = vector.load %arg7[%c0_20, %c64] : memref<8x72xf32, #tpu.memory_space<vmem>>, vector<8x8xf32>
    tpu.vector_store %arg7[%c0_20, %c64], %28 {strides = array<i32>} : memref<8x72xf32, #tpu.memory_space<vmem>>, vector<8x8xf32>,
    return
  }
  func.func @transform_0(%arg0: i32) -> (i32, i32) {
    %c0_i32 = arith.constant 0 : i32
    %c0_i32_0 = arith.constant 0 : i32
    return %arg0, %c0_i32 : i32, i32
  }
  func.func @transform_1(%arg0: i32) -> (i32, i32) {
    %c0_i32 = arith.constant 0 : i32
    %c0_i32_0 = arith.constant 0 : i32
    return %arg0, %c0_i32 : i32, i32
  }
  func.func @transform_2(%arg0: i32) -> (i32, i32, i32) {
    %c0_i32 = arith.constant 0 : i32
    %c0_i32_0 = arith.constant 0 : i32
    %c0_i32_1 = arith.constant 0 : i32
    return %arg0, %c0_i32, %c0_i32_0 : i32, i32, i32
  }
  func.func @transform_3(%arg0: i32) -> (i32, i32, i32) {
    %c0_i32 = arith.constant 0 : i32
    %c0_i32_0 = arith.constant 0 : i32
    %c0_i32_1 = arith.constant 0 : i32
    return %arg0, %c0_i32, %c0_i32_0 : i32, i32, i32
  }
  func.func @transform_4(%arg0: i32) -> (i32, i32) {
    %c0_i32 = arith.constant 0 : i32
    %c0_i32_0 = arith.constant 0 : i32
    %c0_i32_1 = arith.constant 0 : i32
    return %c0_i32, %c0_i32_0 : i32, i32
  }
  func.func @transform_5(%arg0: i32) -> (i32, i32) {
    %c0_i32 = arith.constant 0 : i32
    %c0_i32_0 = arith.constant 0 : i32
    %c0_i32_1 = arith.constant 0 : i32
    return %c0_i32, %c0_i32_0 : i32, i32
  }
  func.func @transform_6(%arg0: i32) -> (i32, i32) {
    %c0_i32 = arith.constant 0 : i32
    %c0_i32_0 = arith.constant 0 : i32
    return %arg0, %c0_i32 : i32, i32
  }
}

</mosaic_0001>

<llo_original>
// kernel: tpu_custom_call.1
$region0: #{tpu_custom_call.1}
  #allocation0 [shape = 'u32[]', space=smem, size = 0x4, offset = 0x4, fixed_abs, tag = 'smem constant byte address 0x4 - core index']
  #allocation1 [shape = 'u32[144,128]{1,0:T(1,128)}', space=vmem, size = 0x12000, scoped, tag = 'internal scratch']
  %s0 = inlined_call_operand.vmem [shape: f32[8,32], index: 0, kind: input, shape index: {}]
  %s1 = inlined_call_operand.vmem [shape: s32[8,1], index: 1, kind: input, shape index: {}]
  %s2 = inlined_call_operand.hbm [shape: bf16[8,8,32], index: 2, kind: input, shape index: {}]
  %s3 = inlined_call_operand.hbm [shape: bf16[8,8,64], index: 3, kind: input, shape index: {}]
  %s4 = inlined_call_operand.hbm [shape: f32[32,32], index: 4, kind: input, shape index: {}]
  %s5 = inlined_call_operand.vmem [shape: f32[1,32], index: 5, kind: input, shape index: {}]
  %s6 = inlined_call_operand.hbm [shape: f32[8,72], index: 6, kind: output, shape index: {}]
  %s7 = sld [smem:[#allocation0]]
  $region46: #{tpu_custom_call.1} parent=0
    _
  %s9 = ssub.s32 1, %s7
  %s10 = scalar_select 0, %s9, %s7
  $region1: #{tpu_custom_call.1} parent=0
    #allocation2 [shape = 'u8[16384]{0}', space=vmem, size = 0x4000, scoped, tag = 'input window, operand 2, single buffered']
    #allocation3 [shape = 's32[1]{0}', space=sflag, size = 0x4, scoped, tag = 'scoped memory for tpu_custom_call.1']
    #allocation4 [shape = 's32[1]{0}', space=sflag, size = 0x4, scoped, tag = 'scoped memory for tpu_custom_call.1']
    #allocation5 [shape = 'u8[16384]{0}', space=vmem, size = 0x4000, scoped, tag = 'input window, operand 3, single buffered']
    #allocation6 [shape = 's32[1]{0}', space=sflag, size = 0x4, scoped, tag = 'scoped memory for tpu_custom_call.1']
    #allocation7 [shape = 'u8[16384]{0}', space=vmem, size = 0x4000, scoped, tag = 'input window, operand 4, single buffered']
    #allocation8 [shape = 'u8[4096]{0}', space=vmem, size = 0x1000, scoped, tag = 'output window, operand 0, single buffered']
    %11 = vsyncpa [#allocation3], 0
    %12 = vsyncpa [#allocation6], 0
    %13 = vsyncpa [#allocation4], 0
    // Predicated region
    $region2: #{tpu_custom_call.1} parent=1 // pred_check
      _
    $region3: #{tpu_custom_call.1} parent=1 // pred_check_branch
      %15 = sbr.rel (0) target = $region5
    $region4: #{tpu_custom_call.1} parent=1 // pred_region
      _
    $region5: #{tpu_custom_call.1} parent=1 // pred_fallthru
      _
    // Predicated region
    $region6: #{tpu_custom_call.1} parent=1 // pred_check
      _
    $region7: #{tpu_custom_call.1} parent=1 // pred_check_branch
      %17 = sbr.rel (0) target = $region9
    $region8: #{tpu_custom_call.1} parent=1 // pred_region
      _
    $region9: #{tpu_custom_call.1} parent=1 // pred_fallthru
      _
    // Predicated region
    $region10: #{tpu_custom_call.1} parent=1 // pred_check
      _
    $region11: #{tpu_custom_call.1} parent=1 // pred_check_branch
      %19 = sbr.rel (0) target = $region13
    $region12: #{tpu_custom_call.1} parent=1 // pred_region
      %s21 = ssub.s32 512, 512
      %22 = vsyncadd [#allocation3], %s21
      %s23 = sshll.u32 [#allocation2], 4
      %s24 = int_to_ptr.vmem [resolvable:$true] %s23
      %29 = dma.hbm_to_vmem [thread:$0]  %s2, 512, %s24, [#allocation3], 64, 64, 4
    $region13: #{tpu_custom_call.1} parent=1 // pred_fallthru
      _
    // Predicated region
    $region14: #{tpu_custom_call.1} parent=1 // pred_check
      _
    $region15: #{tpu_custom_call.1} parent=1 // pred_check_branch
      %31 = sbr.rel (0) target = $region17
    $region16: #{tpu_custom_call.1} parent=1 // pred_region
      %s33 = ssub.s32 512, 512
      %34 = vsyncadd [#allocation6], %s33
      %s35 = sshll.u32 [#allocation5], 4
      %s36 = int_to_ptr.vmem [resolvable:$true] %s35
      %41 = dma.hbm_to_vmem [thread:$0]  %s3, 512, %s36, [#allocation6], 64, 64, 4
    $region17: #{tpu_custom_call.1} parent=1 // pred_fallthru
      _
    // Predicated region
    $region18: #{tpu_custom_call.1} parent=1 // pred_check
      _
    $region19: #{tpu_custom_call.1} parent=1 // pred_check_branch
      %43 = sbr.rel (0) target = $region21
    $region20: #{tpu_custom_call.1} parent=1 // pred_region
      %s45 = ssub.s32 512, 512
      %46 = vsyncadd [#allocation6], %s45
      %s47 = sshll.u32 [#allocation7], 4
      %s48 = int_to_ptr.vmem [resolvable:$true] %s47
      %53 = dma.hbm_to_vmem [thread:$0]  %s4, 512, %s48, [#allocation6], 128, 128, 8
    $region21: #{tpu_custom_call.1} parent=1 // pred_fallthru
      _
    // Predicated region
    $region22: #{tpu_custom_call.1} parent=1 // pred_check
      _
    $region23: #{tpu_custom_call.1} parent=1 // pred_check_branch
      %55 = sbr.rel (0) target = $region25
    $region24: #{tpu_custom_call.1} parent=1 // pred_region
      _
    $region25: #{tpu_custom_call.1} parent=1 // pred_fallthru
      _
    // Predicated region
    $region26: #{tpu_custom_call.1} parent=1 // pred_check
      _
    $region27: #{tpu_custom_call.1} parent=1 // pred_check_branch
      %57 = sbr.rel (0) target = $region29
    $region28: #{tpu_custom_call.1} parent=1 // pred_region
      %58 = dma.done [#allocation3], 512
    $region29: #{tpu_custom_call.1} parent=1 // pred_fallthru
      _
    // Predicated region
    $region30: #{tpu_custom_call.1} parent=1 // pred_check
      _
    $region31: #{tpu_custom_call.1} parent=1 // pred_check_branch
      %60 = sbr.rel (0) target = $region33
    $region32: #{tpu_custom_call.1} parent=1 // pred_region
      %61 = dma.done [#allocation6], 512
    $region33: #{tpu_custom_call.1} parent=1 // pred_fallthru
      _
    // Predicated region
    $region34: #{tpu_custom_call.1} parent=1 // pred_check
      _
    $region35: #{tpu_custom_call.1} parent=1 // pred_check_branch
      %63 = sbr.rel (0) target = $region37
    $region36: #{tpu_custom_call.1} parent=1 // pred_region
      %64 = dma.done [#allocation6], 512
    $region37: #{tpu_custom_call.1} parent=1 // pred_fallthru
      _
    %v65 = vld [vmem:[%s0] sm:$0xff]
    %v66 = vld [vmem:[#allocation7] sm:$0xff]
    %v67 = vld [vmem:[#allocation7 + $0x8] sm:$0xff]
    %v68 = vld [vmem:[#allocation7 + $0x10] sm:$0xff]
    %v69 = vld [vmem:[#allocation7 + $0x18] sm:$0xff]
    %v70 = vld [vmem:[%s5] sm:$0x1]
    %v71 = vld [vmem:[%s1] sm:$0xff]
    %vm72 = vcmask 261120
    %v74 = vsel %vm72, %v65, 0
    %76 = vmatprep.subr.mxu0 0.0
    %77 = vmatpush1.msra.mxu0 %v66
    %78 = vmatprep.subr.mxu0 0.0
    %79 = vmatpush1.msra.mxu0 %v67
    %80 = vmatprep.subr.mxu0 0.0
    %81 = vmatpush1.msra.mxu0 %v68
    %82 = vmatprep.subr.mxu0 0.0
    %83 = vmatpush1.msra.mxu0 %v69
    %84 = vmatprep.subr.mxu0 0.0
    %85 = vmatpush1.msra.mxu0 0.0
    %86 = vmatprep.subr.mxu0 0.0
    %87 = vmatpush1.msra.mxu0 0.0
    %88 = vmatprep.subr.mxu0 0.0
    %89 = vmatpush1.msra.mxu0 0.0
    %90 = vmatprep.subr.mxu0 0.0
    %91 = vmatpush1.msra.mxu0 0.0
    %92 = vmatprep.subr.mxu0 0.0
    %93 = vmatpush1.msra.mxu0 0.0
    %94 = vmatprep.subr.mxu0 0.0
    %95 = vmatpush1.msra.mxu0 0.0
    %96 = vmatprep.subr.mxu0 0.0
    %97 = vmatpush1.msra.mxu0 0.0
    %98 = vmatprep.subr.mxu0 0.0
    %99 = vmatpush1.msra.mxu0 0.0
    %100 = vmatprep.subr.mxu0 0.0
    %101 = vmatpush1.msra.mxu0 0.0
    %102 = vmatprep.subr.mxu0 0.0
    %103 = vmatpush1.msra.mxu0 0.0
    %104 = vmatprep.subr.mxu0 0.0
    %105 = vmatpush1.msra.mxu0 0.0
    %106 = vmatprep.subr.mxu0 0.0
    %107 = vmatpush1.msra.mxu0 0.0
    %108 = vmatprep.subr.mxu0 0.0
    %109 = vmatpush1.msra.mxu0 0.0
    %110 = vmatprep.subr.mxu0 0.0
    %111 = vmatpush1.msra.mxu0 0.0
    %112 = vmatprep.subr.mxu0 0.0
    %113 = vmatpush1.msra.mxu0 0.0
    %114 = vmatprep.subr.mxu0 0.0
    %115 = vmatpush1.msra.mxu0 0.0
    %116 = vmatprep.subr.mxu0 0.0
    %117 = vmatpush1.msra.mxu0 0.0
    %118 = vmatprep.subr.mxu0 0.0
    %119 = vmatpush1.msra.mxu0 0.0
    %120 = vmatprep.subr.mxu0 0.0
    %121 = vmatpush1.msra.mxu0 0.0
    %122 = vmatprep.subr.mxu0 0.0
    %123 = vmatpush1.msra.mxu0 0.0
    %124 = vmatprep.subr.mxu0 0.0
    %125 = vmatpush1.msra.mxu0 0.0
    %126 = vmatprep.subr.mxu0 0.0
    %127 = vmatpush1.msra.mxu0 0.0
    %128 = vmatprep.subr.mxu0 0.0
    %129 = vmatpush1.msra.mxu0 0.0
    %130 = vmatprep.subr.mxu0 0.0
    %131 = vmatpush1.msra.mxu0 0.0
    %132 = vmatprep.subr.mxu0 0.0
    %133 = vmatpush1.msra.mxu0 0.0
    %134 = vmatprep.subr.mxu0 0.0
    %135 = vmatpush1.msra.mxu0 0.0
    %136 = vmatprep.subr.mxu0 0.0
    %137 = vmatpush1.msra.mxu0 0.0
    %138 = vmatprep.subr.mxu0 0.0
    %139 = vmatpush1.msra.mxu0 0.0
    %140 = vmatprep.mubr.f32.mxu0 0.0
    %141 = vmatmul.mubr.f32.gmra.mrb[0].mxu0 %v74
    %v142 = vpop.f32.mrb[0].mxu0
    %v143 = vadd.f32 0.0, %v142
    %v144 = vpop.f32.mrb[0].mxu0
    %145 = vdwg.mxu0
    %v146 = vld [vmem:[#allocation2] sm:$0xf]
    %v147 = vld [vmem:[#allocation2 + $0x4] sm:$0xf]
    %v148 = vld [vmem:[#allocation2 + $0x8] sm:$0xf]
    %v149 = vld [vmem:[#allocation2 + $0xc] sm:$0xf]
    %v150 = vld [vmem:[#allocation2 + $0x10] sm:$0xf]
    %v151 = vld [vmem:[#allocation2 + $0x14] sm:$0xf]
    %v152 = vld [vmem:[#allocation2 + $0x18] sm:$0xf]
    %v153 = vld [vmem:[#allocation2 + $0x1c] sm:$0xf]
    %v154 = vunpack.c.l.bf16 %v146
    %v155 = vunpack.c.l.bf16 %v147
    %v156 = vunpack.c.l.bf16 %v148
    %v157 = vunpack.c.l.bf16 %v149
    %v158 = vunpack.c.l.bf16 %v150
    %v159 = vunpack.c.l.bf16 %v151
    %v160 = vunpack.c.l.bf16 %v152
    %v161 = vunpack.c.l.bf16 %v153
    %v163 = vcombine.high %v143, %v143
    %v165 = vunpack.c.l.s4 1966171168
    %v166 = vunpack.c.0.s8 %v165
    %v167 = vlaneseq
    %v168 = vshrl.u32 %v167, 7
    %v169 = vsub.s32 %v166, %v168
    %v170 = vrot.slane %v143, %v169
    %v172 = vunpack.c.l.s4 1966171168
    %v173 = vunpack.c.0.s8 %v172
    %v174 = vlaneseq
    %v175 = vshrl.u32 %v174, 7
    %v176 = vsub.s32 %v173, %v175
    %v177 = vrot.slane %v163, %v176
    %v178 = vcombine.high %v170, %v170
    %v179 = vcombine.high %v177, %v177
    %v181 = vunpack.c.l.s4 1966171168
    %v182 = vunpack.c.0.s8 %v181
    %v183 = vlaneseq
    %v184 = vshrl.u32 %v183, 7
    %v185 = vsub.s32 %v182, %v184
    %v186 = vrot.slane %v170, %v185
    %v188 = vunpack.c.l.s4 1966171168
    %v189 = vunpack.c.0.s8 %v188
    %v190 = vlaneseq
    %v191 = vshrl.u32 %v190, 7
    %v192 = vsub.s32 %v189, %v191
    %v193 = vrot.slane %v177, %v192
    %v195 = vunpack.c.l.s4 1966171168
    %v196 = vunpack.c.0.s8 %v195
    %v197 = vlaneseq
    %v198 = vshrl.u32 %v197, 7
    %v199 = vsub.s32 %v196, %v198
    %v200 = vrot.slane %v178, %v199
    %v202 = vunpack.c.l.s4 1966171168
    %v203 = vunpack.c.0.s8 %v202
    %v204 = vlaneseq
    %v205 = vshrl.u32 %v204, 7
    %v206 = vsub.s32 %v203, %v205
    %v207 = vrot.slane %v179, %v206
    %v208 = vcombine.high %v186, %v186
    %v209 = vcombine.high %v193, %v193
    %v210 = vcombine.high %v200, %v200
    %v211 = vcombine.high %v207, %v207
    %v212 = vlaneseq
    %v213 = vshrl.u32 %v212, 7
    %v214 = vsub.s32 0, %v213
    %v215 = vrot.slane %v186, %v214
    %v216 = vlaneseq
    %v217 = vshrl.u32 %v216, 7
    %v218 = vsub.s32 0, %v217
    %v219 = vrot.slane %v200, %v218
    %v220 = vlaneseq
    %v221 = vshrl.u32 %v220, 7
    %v222 = vsub.s32 0, %v221
    %v223 = vrot.slane %v208, %v222
    %v224 = vlaneseq
    %v225 = vshrl.u32 %v224, 7
    %v226 = vsub.s32 0, %v225
    %v227 = vrot.slane %v210, %v226
    %v228 = vlaneseq
    %v229 = vshrl.u32 %v228, 7
    %v230 = vsub.s32 0, %v229
    %v231 = vrot.slane %v193, %v230
    %v232 = vlaneseq
    %v233 = vshrl.u32 %v232, 7
    %v234 = vsub.s32 0, %v233
    %v235 = vrot.slane %v207, %v234
    %v236 = vlaneseq
    %v237 = vshrl.u32 %v236, 7
    %v238 = vsub.s32 0, %v237
    %v239 = vrot.slane %v209, %v238
    %v240 = vlaneseq
    %v241 = vshrl.u32 %v240, 7
    %v242 = vsub.s32 0, %v241
    %v243 = vrot.slane %v211, %v242
    %v252 = vadd.f32 %v215, %v154
    %v253 = vadd.f32 %v219, %v155
    %v254 = vadd.f32 %v223, %v156
    %v255 = vadd.f32 %v227, %v157
    %v256 = vadd.f32 %v231, %v158
    %v257 = vadd.f32 %v235, %v159
    %v258 = vadd.f32 %v239, %v160
    %v259 = vadd.f32 %v243, %v161
    %v260 = vtanh.pop %v252
    %v261 = vtanh.pop %v253
    %v262 = vtanh.pop %v254
    %v263 = vtanh.pop %v255
    %v264 = vtanh.pop %v256
    %v265 = vtanh.pop %v257
    %v266 = vtanh.pop %v258
    %v267 = vtanh.pop %v259
    %v269 = vlaneseq
    %v270 = vshrl.u32 %v269, 7
    %v271 = vsub.s32 0, %v270
    %v272 = vrot.slane %v70, %v271
    %v274 = vmul.f32 %v260, %v272
    %v275 = vmul.f32 %v261, %v272
    %v276 = vmul.f32 %v262, %v272
    %v277 = vmul.f32 %v263, %v272
    %v278 = vmul.f32 %v264, %v272
    %v279 = vmul.f32 %v265, %v272
    %v280 = vmul.f32 %v266, %v272
    %v281 = vmul.f32 %v267, %v272
    %v282 = vsel %vm72, %v274, 0.0
    %283 = vadd.xlane.f32.xlu0 %v282
    %v284 = vpop.xlane.xlu0 %283
    %v285 = vsel %vm72, %v275, 0.0
    %286 = vadd.xlane.f32.xlu0 %v285
    %v287 = vpop.xlane.xlu0 %286
    %v288 = vsel %vm72, %v276, 0.0
    %289 = vadd.xlane.f32.xlu0 %v288
    %v290 = vpop.xlane.xlu0 %289
    %v291 = vsel %vm72, %v277, 0.0
    %292 = vadd.xlane.f32.xlu0 %v291
    %v293 = vpop.xlane.xlu0 %292
    %v294 = vsel %vm72, %v278, 0.0
    %295 = vadd.xlane.f32.xlu0 %v294
    %v296 = vpop.xlane.xlu0 %295
    %v297 = vsel %vm72, %v279, 0.0
    %298 = vadd.xlane.f32.xlu0 %v297
    %v299 = vpop.xlane.xlu0 %298
    %v300 = vsel %vm72, %v280, 0.0
    %301 = vadd.xlane.f32.xlu0 %v300
    %v302 = vpop.xlane.xlu0 %301
    %v303 = vsel %vm72, %v281, 0.0
    %304 = vadd.xlane.f32.xlu0 %v303
    %v305 = vpop.xlane.xlu0 %304
    %v306 = vlaneseq
    %v307 = vand.u32 %v306, 127
    %308 = vset.pattern.permute.xlu0 0
    %309 = vperm.xlu0 %308, %v71
    %v310 = vpop.permute.xlu0 %309
    %vm311 = vcmp.lt.s32.totalorder %v307, %v310
    %v320 = vlaneseq
    %v321 = vshrl.u32 %v320, 7
    %v322 = vsub.s32 %v307, %v321
    %v323 = vrot.slane %v284, %v322
    %v324 = vlaneseq
    %v325 = vshrl.u32 %v324, 7
    %v326 = vsub.s32 %v307, %v325
    %v327 = vrot.slane %v287, %v326
    %v328 = vlaneseq
    %v329 = vshrl.u32 %v328, 7
    %v330 = vsub.s32 %v307, %v329
    %v331 = vrot.slane %v290, %v330
    %v332 = vlaneseq
    %v333 = vshrl.u32 %v332, 7
    %v334 = vsub.s32 %v307, %v333
    %v335 = vrot.slane %v293, %v334
    %v336 = vlaneseq
    %v337 = vshrl.u32 %v336, 7
    %v338 = vsub.s32 %v307, %v337
    %v339 = vrot.slane %v296, %v338
    %v340 = vlaneseq
    %v341 = vshrl.u32 %v340, 7
    %v342 = vsub.s32 %v307, %v341
    %v343 = vrot.slane %v299, %v342
    %v344 = vlaneseq
    %v345 = vshrl.u32 %v344, 7
    %v346 = vsub.s32 %v307, %v345
    %v347 = vrot.slane %v302, %v346
    %v348 = vlaneseq
    %v349 = vshrl.u32 %v348, 7
    %v350 = vsub.s32 %v307, %v349
    %v351 = vrot.slane %v305, %v350
    %vm352 = vcmask 1041409
    %v353 = vsel %vm352, %v327, %v323
    %vm354 = vcmask 1042434
    %v355 = vsel %vm354, %v331, %v353
    %vm356 = vcmask 1043459
    %v357 = vsel %vm356, %v335, %v355
    %vm358 = vcmask 1044484
    %v359 = vsel %vm358, %v339, %v357
    %vm360 = vcmask 1045509
    %v361 = vsel %vm360, %v343, %v359
    %vm362 = vcmask 1046534
    %v363 = vsel %vm362, %v347, %v361
    %vm364 = vcmask 1047559
    %v365 = vsel %vm364, %v351, %v363
    %v367 = vsel %vm311, %v365, -inf
    %vm368 = vcmask 64512
    %v369 = vsel %vm368, %v367, -inf
    %370 = vmax.xlane.f32.xlu0 %v369
    %v371 = vpop.xlane.xlu0 %370
    %v372 = vsub.f32 %v367, %v371
    %v373 = vmul.f32 %v372, 1.442695
    %v374 = vpow.pop %v373
    %v375 = vsel %vm368, %v374, 0.0
    %376 = vadd.xlane.f32.xlu0 %v375
    %v377 = vpop.xlane.xlu0 %376
    %v378 = vrcp.pop %v377
    %v379 = vmul.f32 %v374, %v378
    %v380 = vld [vmem:[#allocation5] sm:$0xf]
    %v381 = vld [vmem:[#allocation5 + $0x4] sm:$0xf]
    %v382 = vld [vmem:[#allocation5 + $0x8] sm:$0xf]
    %v383 = vld [vmem:[#allocation5 + $0xc] sm:$0xf]
    %v384 = vld [vmem:[#allocation5 + $0x10] sm:$0xf]
    %v385 = vld [vmem:[#allocation5 + $0x14] sm:$0xf]
    %v386 = vld [vmem:[#allocation5 + $0x18] sm:$0xf]
    %v387 = vld [vmem:[#allocation5 + $0x1c] sm:$0xf]
    %v388 = vunpack.c.l.bf16 %v380
    %v389 = vunpack.c.l.bf16 %v381
    %v390 = vunpack.c.l.bf16 %v382
    %v391 = vunpack.c.l.bf16 %v383
    %v392 = vunpack.c.l.bf16 %v384
    %v393 = vunpack.c.l.bf16 %v385
    %v394 = vunpack.c.l.bf16 %v386
    %v395 = vunpack.c.l.bf16 %v387
    %v396 = vlaneseq
    %v397 = vshrl.u32 %v396, 7
    %v398 = vsub.s32 0, %v397
    %v399 = vrot.slane %v379, %v398
    %401 = vbcast.lane.b32.xlu0 %v399, 256
    %v402 = vpop.permute.xlu0 %401
    %v403 = vlaneseq
    %v404 = vshrl.u32 %v403, 7
    %v405 = vsub.s32 1, %v404
    %v406 = vrot.slane %v379, %v405
    %408 = vbcast.lane.b32.xlu0 %v406, 256
    %v409 = vpop.permute.xlu0 %408
    %v410 = vlaneseq
    %v411 = vshrl.u32 %v410, 7
    %v412 = vsub.s32 2, %v411
    %v413 = vrot.slane %v379, %v412
    %415 = vbcast.lane.b32.xlu0 %v413, 256
    %v416 = vpop.permute.xlu0 %415
    %v417 = vlaneseq
    %v418 = vshrl.u32 %v417, 7
    %v419 = vsub.s32 3, %v418
    %v420 = vrot.slane %v379, %v419
    %422 = vbcast.lane.b32.xlu0 %v420, 256
    %v423 = vpop.permute.xlu0 %422
    %v424 = vlaneseq
    %v425 = vshrl.u32 %v424, 7
    %v426 = vsub.s32 4, %v425
    %v427 = vrot.slane %v379, %v426
    %429 = vbcast.lane.b32.xlu0 %v427, 256
    %v430 = vpop.permute.xlu0 %429
    %v431 = vlaneseq
    %v432 = vshrl.u32 %v431, 7
    %v433 = vsub.s32 5, %v432
    %v434 = vrot.slane %v379, %v433
    %436 = vbcast.lane.b32.xlu0 %v434, 256
    %v437 = vpop.permute.xlu0 %436
    %v438 = vlaneseq
    %v439 = vshrl.u32 %v438, 7
    %v440 = vsub.s32 6, %v439
    %v441 = vrot.slane %v379, %v440
    %443 = vbcast.lane.b32.xlu0 %v441, 256
    %v444 = vpop.permute.xlu0 %443
    %v445 = vlaneseq
    %v446 = vshrl.u32 %v445, 7
    %v447 = vsub.s32 7, %v446
    %v448 = vrot.slane %v379, %v447
    %450 = vbcast.lane.b32.xlu0 %v448, 256
    %v451 = vpop.permute.xlu0 %450
    %v452 = vmul.f32 %v402, %v388
    %v453 = vmul.f32 %v409, %v389
    %v454 = vmul.f32 %v416, %v390
    %v455 = vmul.f32 %v423, %v391
    %v456 = vmul.f32 %v430, %v392
    %v457 = vmul.f32 %v437, %v393
    %v458 = vmul.f32 %v444, %v394
    %v459 = vmul.f32 %v451, %v395
    %vm460 = vcmask 523264
    %v461 = vsel %vm460, %v452, 0.0
    %v462 = vrot.slane %v461, 4
    %v463 = vadd.f32 %v461, %v462
    %v464 = vrot.slane %v463, 2
    %v465 = vadd.f32 %v463, %v464
    %v466 = vrot.slane %v465, 1
    %v467 = vadd.f32 %v465, %v466
    %v468 = vsel %vm460, %v453, 0.0
    %v469 = vrot.slane %v468, 4
    %v470 = vadd.f32 %v468, %v469
    %v471 = vrot.slane %v470, 2
    %v472 = vadd.f32 %v470, %v471
    %v473 = vrot.slane %v472, 1
    %v474 = vadd.f32 %v472, %v473
    %v475 = vsel %vm460, %v454, 0.0
    %v476 = vrot.slane %v475, 4
    %v477 = vadd.f32 %v475, %v476
    %v478 = vrot.slane %v477, 2
    %v479 = vadd.f32 %v477, %v478
    %v480 = vrot.slane %v479, 1
    %v481 = vadd.f32 %v479, %v480
    %v482 = vsel %vm460, %v455, 0.0
    %v483 = vrot.slane %v482, 4
    %v484 = vadd.f32 %v482, %v483
    %v485 = vrot.slane %v484, 2
    %v486 = vadd.f32 %v484, %v485
    %v487 = vrot.slane %v486, 1
    %v488 = vadd.f32 %v486, %v487
    %v489 = vsel %vm460, %v456, 0.0
    %v490 = vrot.slane %v489, 4
    %v491 = vadd.f32 %v489, %v490
    %v492 = vrot.slane %v491, 2
    %v493 = vadd.f32 %v491, %v492
    %v494 = vrot.slane %v493, 1
    %v495 = vadd.f32 %v493, %v494
    %v496 = vsel %vm460, %v457, 0.0
    %v497 = vrot.slane %v496, 4
    %v498 = vadd.f32 %v496, %v497
    %v499 = vrot.slane %v498, 2
    %v500 = vadd.f32 %v498, %v499
    %v501 = vrot.slane %v500, 1
    %v502 = vadd.f32 %v500, %v501
    %v503 = vsel %vm460, %v458, 0.0
    %v504 = vrot.slane %v503, 4
    %v505 = vadd.f32 %v503, %v504
    %v506 = vrot.slane %v505, 2
    %v507 = vadd.f32 %v505, %v506
    %v508 = vrot.slane %v507, 1
    %v509 = vadd.f32 %v507, %v508
    %v510 = vsel %vm460, %v459, 0.0
    %v511 = vrot.slane %v510, 4
    %v512 = vadd.f32 %v510, %v511
    %v513 = vrot.slane %v512, 2
    %v514 = vadd.f32 %v512, %v513
    %v515 = vrot.slane %v514, 1
    %v516 = vadd.f32 %v514, %v515
    %v525 = vsel %vm352, %v474, %v467
    %v526 = vsel %vm354, %v481, %v525
    %v527 = vsel %vm356, %v488, %v526
    %v528 = vsel %vm358, %v495, %v527
    %v529 = vsel %vm360, %v502, %v528
    %v530 = vsel %vm362, %v509, %v529
    %v531 = vsel %vm364, %v516, %v530
    %533 = vst.msk [vmem:[#allocation8] sm:$0xff] %vm460, %v531
    %535 = vrot.lane.b32.xlu0 %v379, 64
    %v536 = vpop.permute.xlu0 %535
    %vm538 = vcmask 589312
    %539 = vst.msk [vmem:[#allocation8] sm:$0xff] %vm538, %v536
    // Predicated region
    $region38: #{tpu_custom_call.1} parent=1 // pred_check
      _
    $region39: #{tpu_custom_call.1} parent=1 // pred_check_branch
      %541 = sbr.rel (0) target = $region41
    $region40: #{tpu_custom_call.1} parent=1 // pred_region
      %s543 = ssub.s32 128, 128
      %544 = vsyncadd [#allocation4], %s543
      %s546 = sshll.u32 [#allocation8], 4
      %s547 = int_to_ptr.vmem [resolvable:$true] %s546
      %549 = dma.vmem_to_hbm [thread:$0]  %s547, 128, %s6, [#allocation4]
    $region41: #{tpu_custom_call.1} parent=1 // pred_fallthru
      _
    // Predicated region
    $region42: #{tpu_custom_call.1} parent=1 // pred_check
      _
    $region43: #{tpu_custom_call.1} parent=1 // pred_check_branch
      %551 = sbr.rel (0) target = $region45
    $region44: #{tpu_custom_call.1} parent=1 // pred_region
      %552 = dma.done [#allocation4], 128
    $region45: #{tpu_custom_call.1} parent=1 // pred_fallthru
      _
    %553 = vsyncpa [#allocation3], 1
    %554 = vsyncpa [#allocation6], 1
    %555 = vsyncpa [#allocation4], 1

</llo_original>
